<compile_context>
chip_gen: v7x
topology: tpu7x:2x2x1
jax: 0.10.0
libtpu: 0.0.40
codegen_flags: <defaults>
</compile_context>

<pallas_src>
import math
import numpy as np
import jax
import jax.numpy as jnp
from jax import lax
from jax.experimental import pallas as pl
from jax.experimental.pallas import tpu as pltpu

TIMESTEPS = 1000
CHANNELS = 4          # model.channels == c (image channels fed to forward)
TIME_EMB_DIM = 16     # synthetic time-embedding width


# ----------------------------------------------------------------------------
# Diffusion schedule buffers (sigmoid schedule, objective='pred_v', no min-snr).
# Computed in float64 (matching torch) then cast to float32 like register_buffer.
# ----------------------------------------------------------------------------
def sigmoid_beta_schedule_np(timesteps, start=-3, end=3, tau=1):
    steps = timesteps + 1
    t = np.linspace(0, timesteps, steps, dtype=np.float64) / timesteps
    sigmoid = lambda z: 1.0 / (1.0 + np.exp(-z))
    v_start = sigmoid(start / tau)
    v_end = sigmoid(end / tau)
    alphas_cumprod = (-sigmoid((t * (end - start) + start) / tau) + v_end) / (v_end - v_start)
    alphas_cumprod = alphas_cumprod / alphas_cumprod[0]
    betas = 1.0 - alphas_cumprod[1:] / alphas_cumprod[:-1]
    return np.clip(betas, 0.0, 0.999)


def make_buffers(timesteps):
    betas = sigmoid_beta_schedule_np(timesteps)
    alphas = 1.0 - betas
    alphas_cumprod = np.cumprod(alphas)
    snr = alphas_cumprod / (1.0 - alphas_cumprod)
    loss_weight = snr / (snr + 1.0)  # objective == 'pred_v', min_snr_loss_weight=False
    return {
        "sqrt_alphas_cumprod": jnp.asarray(np.sqrt(alphas_cumprod), jnp.float32),
        "sqrt_one_minus_alphas_cumprod": jnp.asarray(np.sqrt(1.0 - alphas_cumprod), jnp.float32),
        "loss_weight": jnp.asarray(loss_weight, jnp.float32),
    }


def time_bias(t, params):
    """Synthetic sinusoidal time embedding -> per-(batch, channel) bias."""
    half = TIME_EMB_DIM // 2
    freqs = jnp.exp(-math.log(10000.0) * jnp.arange(half, dtype=jnp.float32) / (half - 1))
    args = t.astype(jnp.float32)[:, None] * freqs[None, :]
    emb = jnp.concatenate([jnp.sin(args), jnp.cos(args)], axis=1)       # (b, TIME_EMB_DIM)
    return emb @ params["w_time"] + params["b_time"]                    # (b, c)


# ----------------------------------------------------------------------------
# Kernel: grid = (row blocks of b*c, hw blocks). Everything is f32 VPU math on
# dense (8, L) slabs; the 8x8 block-diagonal channel mix is 8 broadcast-FMAs.
# ----------------------------------------------------------------------------
def _make_kernel(c, n_slabs):
    gps = 8 // c  # groups (batch items) per 8-row sublane slab

    def kernel(img_ref, noise_ref, sa_ref, so_ref, bias_ref, lwn_ref,
               wx_ref, wm_ref, out_ref, acc_ref):
        l_idx = pl.program_id(1)

        @pl.when(l_idx == 0)
        def _init():
            acc_ref[...] = jnp.zeros_like(acc_ref)

        # Hoist the tiny per-slab weight columns (identical for every slab/block).
        wx_cols = [wx_ref[k * 8:(k + 1) * 8, :] for k in range(8)]    # each (8, 1)
        wm_cols = [wm_ref[g * 8:(g + 1) * 8, :] for g in range(gps)]  # each (8, 1)

        def slab_body(s, carry):
            r0 = pl.multiple_of(s * 8, 8)
            rows = pl.ds(r0, 8)
            img = img_ref[rows, :].astype(jnp.float32)     # (8, L)  bf16 -> f32
            noi = noise_ref[rows, :].astype(jnp.float32)   # (8, L)
            sa = sa_ref[rows, :]                           # (8, 1)  sqrt(alphas_cumprod)[t]
            so = so_ref[rows, :]                           # (8, 1)  sqrt(1 - alphas_cumprod)[t]

            xs = 2.0 * img - 1.0                           # normalize_to_neg_one_to_one (fused)
            x_t = sa * xs + so * noi                       # q_sample
            tgt = sa * noi - so * xs                       # v-parameterization target

            # synthetic model(cat([x_t, mask]), t): block-diag 1x1 conv + mask + bias
            mo = bias_ref[rows, :]                         # (8, 1) -> broadcasts over lanes
            for g in range(gps):
                mask = (xs[g * c:g * c + 1, :] != 0.0).astype(jnp.float32)  # (1, L)
                mo = mo + wm_cols[g] * mask
            for k in range(8):
                mo = mo + wx_cols[k] * x_t[k:k + 1, :]

            d = mo - tgt
            acc_ref[rows, :] += d * d                      # defer the lane reduction
            return carry

        lax.fori_loop(0, n_slabs, slab_body, 0, unroll=(n_slabs <= 4))

        @pl.when(l_idx == pl.num_programs(1) - 1)
        def _finalize():
            # single cross-lane reduce per row block; loss_weight/(b*c*hw) folded in
            out_ref[...] = lwn_ref[...] * jnp.sum(acc_ref[...], axis=1, keepdims=True)

    return kernel


def _pick_block(total, base, cap):
    """Largest divisor of `total` that is a multiple of `base` and <= cap."""
    best = None
    d = base
    while d <= min(total, cap):
        if total % d == 0:
            best = d
        d += base
    return best if best is not None else total


# ----------------------------------------------------------------------------
# Host wrapper: tiny per-row coefficient prep + pallas_call.
# ----------------------------------------------------------------------------
def gaussian_diffusion_forward(img, t, noise, params, buffers):
    b, c, h, w = img.shape
    hw = h * w
    rows = b * c
    assert 8 % c == 0, "synthetic-model packing assumes channels divide 8"
    assert rows % 8 == 0, "need b*c to be a multiple of 8 (f32 sublane tile)"
    assert hw % 128 == 0, "need h*w to be a multiple of 128 (lane tile)"
    gps = 8 // c

    # --- per-row diffusion coefficients (tiny; stays in XLA) -----------------
    sa_t = buffers["sqrt_alphas_cumprod"][t]                   # (b,)
    so_t = buffers["sqrt_one_minus_alphas_cumprod"][t]
    lw_t = buffers["loss_weight"][t]
    sa_col = jnp.repeat(sa_t, c).reshape(rows, 1).astype(jnp.float32)
    so_col = jnp.repeat(so_t, c).reshape(rows, 1).astype(jnp.float32)
    lwn_col = (jnp.repeat(lw_t, c) / float(b * c * hw)).reshape(rows, 1).astype(jnp.float32)

    t_b = time_bias(t, params)                                 # (b, c)
    bias_col = (params["b_conv"][None, :] + t_b).reshape(rows, 1).astype(jnp.float32)

    # --- per-slab (8-row) mix matrices for the synthetic 1x1 conv ------------
    W = params["w_conv"]                                       # (c, c+1)
    Wx = W[:, :c]
    wmask = W[:, c]
    wx_slab = jnp.kron(jnp.eye(gps, dtype=jnp.float32), Wx)    # (8, 8) block-diagonal
    wx_cols = wx_slab.T.reshape(64, 1).astype(jnp.float32)     # rows [8k, 8k+8) = column k
    grp = jnp.arange(8) // c
    wm_cols = jnp.concatenate(
        [jnp.where(grp == g, jnp.tile(wmask, gps), 0.0) for g in range(gps)]
    ).reshape(gps * 8, 1).astype(jnp.float32)

    # --- dense (b*c, hw) bf16 layout ------------------------------------------
    img_flat = img.reshape(rows, hw).astype(jnp.bfloat16)
    noise_flat = noise.reshape(rows, hw).astype(jnp.bfloat16)

    # --- block sizing: big enough to amortize per-step overhead, small enough
    # for v7x's 64 MiB VMEM (double-buffered inputs + f32 scratch) and to avoid
    # register spills inside the slab loop.
    r_blk = _pick_block(rows, 8, 128)
    l_blk = _pick_block(hw, 128, 512)
    n_slabs = r_blk // 8
    grid = (rows // r_blk, hw // l_blk)

    tile_map = lambda r, l: (r, l)
    row_map = lambda r, l: (r, 0)
    const_map = lambda r, l: (0, 0)

    kernel = _make_kernel(c, n_slabs)

    row_out = pl.pallas_call(
        kernel,
        out_shape=jax.ShapeDtypeStruct((rows, 1), jnp.float32),
        grid_spec=pltpu.PrefetchScalarGridSpec(
            num_scalar_prefetch=0,
            grid=grid,
            in_specs=[
                pl.BlockSpec((r_blk, l_blk), tile_map),    # img (bf16)
                pl.BlockSpec((r_blk, l_blk), tile_map),    # noise (bf16)
                pl.BlockSpec((r_blk, 1), row_map),         # sqrt_alphas_cumprod[t] per row
                pl.BlockSpec((r_blk, 1), row_map),         # sqrt_one_minus_alphas_cumprod[t]
                pl.BlockSpec((r_blk, 1), row_map),         # model bias + time bias per row
                pl.BlockSpec((r_blk, 1), row_map),         # loss_weight[t] / (b*c*hw) per row
                pl.BlockSpec((64, 1), const_map),          # slab mix-matrix columns
                pl.BlockSpec((gps * 8, 1), const_map),     # slab mask-weight columns
            ],
            out_specs=pl.BlockSpec((r_blk, 1), row_map),   # per-row weighted SSE
            scratch_shapes=[pltpu.VMEM((r_blk, l_blk), jnp.float32)],
        ),
        compiler_params=pltpu.CompilerParams(
            dimension_semantics=("parallel", "arbitrary"),
            vmem_limit_bytes=32 * 1024 * 1024,
        ),
    )(img_flat, noise_flat, sa_col, so_col, bias_col, lwn_col, wx_cols, wm_cols)

    # final tiny reduction over b*c partial sums (safe w.r.t. megacore splitting)
    return jnp.sum(row_out)


# ----------------------------------------------------------------------------
# Pure-JAX reference of the same forward semantics (for a correctness check).
# ----------------------------------------------------------------------------
def reference_loss(img_bf16, t, noise_bf16, params, buffers):
    img = img_bf16.astype(jnp.float32)
    noise = noise_bf16.astype(jnp.float32)
    b, c, h, w = img.shape
    x_start = img * 2.0 - 1.0
    sa = buffers["sqrt_alphas_cumprod"][t][:, None, None, None]
    so = buffers["sqrt_one_minus_alphas_cumprod"][t][:, None, None, None]
    lw = buffers["loss_weight"][t]
    x_t = sa * x_start + so * noise
    mask = (x_start[:, 0:1] != 0.0).astype(jnp.float32)
    W = params["w_conv"]
    mo = (jnp.einsum("oc,bchw->bohw", W[:, :c], x_t,
                     precision=jax.lax.Precision.HIGHEST)
          + W[:, c][None, :, None, None] * mask
          + (params["b_conv"][None, :] + time_bias(t, params))[:, :, None, None])
    target = sa * noise - so * x_start
    se = (mo - target) ** 2          # fluid_loss + solid_loss == plain mse
    per_b = se.reshape(b, -1).mean(axis=1)
    return jnp.mean(per_b * lw)


if __name__ == "__main__":
    key = jax.random.PRNGKey(0)
    b, c, h, w = 2, CHANNELS, 16, 16
    k_img, k_t, k_noise, k_w, k_b, k_wt = jax.random.split(key, 6)

    # deterministic example inputs (img in [0,1) like an un-normalized image)
    img = jax.random.uniform(k_img, (b, c, h, w), jnp.float32).astype(jnp.bfloat16)
    t = jax.random.randint(k_t, (b,), 0, TIMESTEPS)
    noise = jax.random.normal(k_noise, (b, c, h, w), jnp.float32).astype(jnp.bfloat16)

    # deterministic synthetic model parameters
    params = {
        "w_conv": 0.1 * jax.random.normal(k_w, (c, c + 1), jnp.float32),
        "b_conv": 0.01 * jax.random.normal(k_b, (c,), jnp.float32),
        "w_time": 0.1 * jax.random.normal(k_wt, (TIME_EMB_DIM, c), jnp.float32),
        "b_time": jnp.zeros((c,), jnp.float32),
    }
    buffers = make_buffers(TIMESTEPS)

    loss = jax.jit(gaussian_diffusion_forward)(img, t, noise, params, buffers)
    loss = jax.block_until_ready(loss)
    ref = reference_loss(img, t, noise, params, buffers)

    assert loss.shape == () and bool(jnp.isfinite(loss))
    assert abs(float(loss) - float(ref)) <= 1e-3 * max(1.0, abs(float(ref))), (float(loss), float(ref))
    print("KERNEL_OK")
</pallas_src>

<mosaic_0001>
module attributes {stable_mosaic.version = 11 : i64} {
  func.func @kernel(%arg0: i32, %arg1: i32, %arg2: memref<8x256xbf16, #tpu.memory_space<vmem>>, %arg3: memref<8x256xbf16, #tpu.memory_space<vmem>>, %arg4: memref<8x1xf32, #tpu.memory_space<vmem>>, %arg5: memref<8x1xf32, #tpu.memory_space<vmem>>, %arg6: memref<8x1xf32, #tpu.memory_space<vmem>>, %arg7: memref<8x1xf32, #tpu.memory_space<vmem>>, %arg8: memref<64x1xf32, #tpu.memory_space<vmem>>, %arg9: memref<16x1xf32, #tpu.memory_space<vmem>>, %arg10: memref<8x1xf32, #tpu.memory_space<vmem>>, %arg11: memref<8x256xf32, #tpu.memory_space<vmem>>) attributes {dimension_semantics = [#tpu.dimension_semantics<parallel>, #tpu.dimension_semantics<arbitrary>], iteration_bounds = array<i64: 1, 1>, scalar_prefetch = 0 : i64, scratch_operands = 1 : i64, tpu.core_type = #tpu.core_type<tc>, window_params = [{transform_indices = @transform_0, window_bounds = array<i64: 8, 256>}, {transform_indices = @transform_1, window_bounds = array<i64: 8, 256>}, {transform_indices = @transform_2, window_bounds = array<i64: 8, 1>}, {transform_indices = @transform_3, window_bounds = array<i64: 8, 1>}, {transform_indices = @transform_4, window_bounds = array<i64: 8, 1>}, {transform_indices = @transform_5, window_bounds = array<i64: 8, 1>}, {pipeline_mode = #tpu.pipeline_mode<synchronous>, transform_indices = @transform_6, window_bounds = array<i64: 64, 1>}, {pipeline_mode = #tpu.pipeline_mode<synchronous>, transform_indices = @transform_7, window_bounds = array<i64: 16, 1>}, {transform_indices = @transform_8, window_bounds = array<i64: 8, 1>}]} {
    %c0_i32 = arith.constant 0 : i32
    %0 = arith.cmpi eq, %arg1, %c0_i32 : i32
    %1 = arith.extui %0 : i1 to i32
    %c0_i32_0 = arith.constant 0 : i32
    %2 = arith.cmpi ne, %1, %c0_i32_0 : i32
    scf.if %2 {
      %cst_26 = arith.constant 0.000000e+00 : f32
      %110 = vector.broadcast %cst_26 : f32 to vector<8x256xf32>
      %c0_27 = arith.constant 0 : index
      %c0_28 = arith.constant 0 : index
      %111 = vector.load %arg11[%c0_27, %c0_28] : memref<8x256xf32, #tpu.memory_space<vmem>>, vector<8x256xf32>
      tpu.vector_store %arg11[%c0_27, %c0_28], %110 {strides = array<i32>} : memref<8x256xf32, #tpu.memory_space<vmem>>, vector<8x256xf32>,
    } else {
    }
    %c0 = arith.constant 0 : index
    %c0_1 = arith.constant 0 : index
    %3 = vector.load %arg8[%c0, %c0_1] : memref<64x1xf32, #tpu.memory_space<vmem>>, vector<8x1xf32>
    %c8 = arith.constant 8 : index
    %c0_2 = arith.constant 0 : index
    %4 = vector.load %arg8[%c8, %c0_2] : memref<64x1xf32, #tpu.memory_space<vmem>>, vector<8x1xf32>
    %c16 = arith.constant 16 : index
    %c0_3 = arith.constant 0 : index
    %5 = vector.load %arg8[%c16, %c0_3] : memref<64x1xf32, #tpu.memory_space<vmem>>, vector<8x1xf32>
    %c24 = arith.constant 24 : index
    %c0_4 = arith.constant 0 : index
    %6 = vector.load %arg8[%c24, %c0_4] : memref<64x1xf32, #tpu.memory_space<vmem>>, vector<8x1xf32>
    %c32 = arith.constant 32 : index
    %c0_5 = arith.constant 0 : index
    %7 = vector.load %arg8[%c32, %c0_5] : memref<64x1xf32, #tpu.memory_space<vmem>>, vector<8x1xf32>
    %c40 = arith.constant 40 : index
    %c0_6 = arith.constant 0 : index
    %8 = vector.load %arg8[%c40, %c0_6] : memref<64x1xf32, #tpu.memory_space<vmem>>, vector<8x1xf32>
    %c48 = arith.constant 48 : index
    %c0_7 = arith.constant 0 : index
    %9 = vector.load %arg8[%c48, %c0_7] : memref<64x1xf32, #tpu.memory_space<vmem>>, vector<8x1xf32>
    %c56 = arith.constant 56 : index
    %c0_8 = arith.constant 0 : index
    %10 = vector.load %arg8[%c56, %c0_8] : memref<64x1xf32, #tpu.memory_space<vmem>>, vector<8x1xf32>
    %c0_9 = arith.constant 0 : index
    %c0_10 = arith.constant 0 : index
    %11 = vector.load %arg9[%c0_9, %c0_10] : memref<16x1xf32, #tpu.memory_space<vmem>>, vector<8x1xf32>
    %c8_11 = arith.constant 8 : index
    %c0_12 = arith.constant 0 : index
    %12 = vector.load %arg9[%c8_11, %c0_12] : memref<16x1xf32, #tpu.memory_space<vmem>>, vector<8x1xf32>
    %c0_i32_13 = arith.constant 0 : i32
    %c8_i32 = arith.constant 8 : i32
    %13 = arith.muli %c0_i32_13, %c8_i32 : i32
    %14 = tpu.assume_multiple %13, 8 : i32
    %15 = arith.index_cast %14 : i32 to index
    %c0_14 = arith.constant 0 : index
    %16 = vector.load %arg2[%15, %c0_14] : memref<8x256xbf16, #tpu.memory_space<vmem>>, vector<8x256xbf16>
    %17 = arith.extf %16 : vector<8x256xbf16> to vector<8x256xf32>
    %18 = arith.index_cast %14 : i32 to index
    %c0_15 = arith.constant 0 : index
    %19 = vector.load %arg3[%18, %c0_15] : memref<8x256xbf16, #tpu.memory_space<vmem>>, vector<8x256xbf16>
    %20 = arith.extf %19 : vector<8x256xbf16> to vector<8x256xf32>
    %21 = arith.index_cast %14 : i32 to index
    %c0_16 = arith.constant 0 : index
    %22 = vector.load %arg4[%21, %c0_16] : memref<8x1xf32, #tpu.memory_space<vmem>>, vector<8x1xf32>
    %23 = arith.index_cast %14 : i32 to index
    %c0_17 = arith.constant 0 : index
    %24 = vector.load %arg5[%23, %c0_17] : memref<8x1xf32, #tpu.memory_space<vmem>>, vector<8x1xf32>
    %cst = arith.constant 2.000000e+00 : f32
    %25 = vector.broadcast %cst : f32 to vector<8x256xf32>
    %26 = arith.mulf %25, %17 : vector<8x256xf32>
    %cst_18 = arith.constant 1.000000e+00 : f32
    %27 = vector.broadcast %cst_18 : f32 to vector<8x256xf32>
    %28 = arith.subf %26, %27 : vector<8x256xf32>
    %29 = vector.broadcast %22 : vector<8x1xf32> to vector<8x256xf32>
    %30 = arith.mulf %29, %28 : vector<8x256xf32>
    %31 = vector.broadcast %24 : vector<8x1xf32> to vector<8x256xf32>
    %32 = arith.mulf %31, %20 : vector<8x256xf32>
    %33 = arith.addf %30, %32 : vector<8x256xf32>
    %34 = vector.broadcast %22 : vector<8x1xf32> to vector<8x256xf32>
    %35 = arith.mulf %34, %20 : vector<8x256xf32>
    %36 = vector.broadcast %24 : vector<8x1xf32> to vector<8x256xf32>
    %37 = arith.mulf %36, %28 : vector<8x256xf32>
    %38 = arith.subf %35, %37 : vector<8x256xf32>
    %39 = arith.index_cast %14 : i32 to index
    %c0_19 = arith.constant 0 : index
    %40 = vector.load %arg6[%39, %c0_19] : memref<8x1xf32, #tpu.memory_space<vmem>>, vector<8x1xf32>
    %41 = vector.extract_strided_slice %28 {offsets = [0, 0], sizes = [1, 256], strides = [1, 1]} : vector<8x256xf32> to vector<1x256xf32>
    %cst_20 = arith.constant 0.000000e+00 : f32
    %42 = vector.broadcast %cst_20 : f32 to vector<1x256xf32>
    %43 = arith.cmpf one, %41, %42 : vector<1x256xf32>
    %44 = arith.extui %43 : vector<1x256xi1> to vector<1x256xi32>
    %45 = arith.sitofp %44 : vector<1x256xi32> to vector<1x256xf32>
    %46 = vector.broadcast %11 : vector<8x1xf32> to vector<8x256xf32>
    %47 = vector.broadcast %45 : vector<1x256xf32> to vector<8x256xf32>
    %48 = arith.mulf %46, %47 : vector<8x256xf32>
    %49 = vector.broadcast %40 : vector<8x1xf32> to vector<8x256xf32>
    %50 = arith.addf %49, %48 : vector<8x256xf32>
    %51 = vector.extract_strided_slice %28 {offsets = [4, 0], sizes = [1, 256], strides = [1, 1]} : vector<8x256xf32> to vector<1x256xf32>
    %cst_21 = arith.constant 0.000000e+00 : f32
    %52 = vector.broadcast %cst_21 : f32 to vector<1x256xf32>
    %53 = arith.cmpf one, %51, %52 : vector<1x256xf32>
    %54 = arith.extui %53 : vector<1x256xi1> to vector<1x256xi32>
    %55 = arith.sitofp %54 : vector<1x256xi32> to vector<1x256xf32>
    %56 = vector.broadcast %12 : vector<8x1xf32> to vector<8x256xf32>
    %57 = vector.broadcast %55 : vector<1x256xf32> to vector<8x256xf32>
    %58 = arith.mulf %56, %57 : vector<8x256xf32>
    %59 = arith.addf %50, %58 : vector<8x256xf32>
    %60 = vector.extract_strided_slice %33 {offsets = [0, 0], sizes = [1, 256], strides = [1, 1]} : vector<8x256xf32> to vector<1x256xf32>
    %61 = vector.broadcast %3 : vector<8x1xf32> to vector<8x256xf32>
    %62 = vector.broadcast %60 : vector<1x256xf32> to vector<8x256xf32>
    %63 = arith.mulf %61, %62 : vector<8x256xf32>
    %64 = arith.addf %59, %63 : vector<8x256xf32>
    %65 = vector.extract_strided_slice %33 {offsets = [1, 0], sizes = [1, 256], strides = [1, 1]} : vector<8x256xf32> to vector<1x256xf32>
    %66 = vector.broadcast %4 : vector<8x1xf32> to vector<8x256xf32>
    %67 = vector.broadcast %65 : vector<1x256xf32> to vector<8x256xf32>
    %68 = arith.mulf %66, %67 : vector<8x256xf32>
    %69 = arith.addf %64, %68 : vector<8x256xf32>
    %70 = vector.extract_strided_slice %33 {offsets = [2, 0], sizes = [1, 256], strides = [1, 1]} : vector<8x256xf32> to vector<1x256xf32>
    %71 = vector.broadcast %5 : vector<8x1xf32> to vector<8x256xf32>
    %72 = vector.broadcast %70 : vector<1x256xf32> to vector<8x256xf32>
    %73 = arith.mulf %71, %72 : vector<8x256xf32>
    %74 = arith.addf %69, %73 : vector<8x256xf32>
    %75 = vector.extract_strided_slice %33 {offsets = [3, 0], sizes = [1, 256], strides = [1, 1]} : vector<8x256xf32> to vector<1x256xf32>
    %76 = vector.broadcast %6 : vector<8x1xf32> to vector<8x256xf32>
    %77 = vector.broadcast %75 : vector<1x256xf32> to vector<8x256xf32>
    %78 = arith.mulf %76, %77 : vector<8x256xf32>
    %79 = arith.addf %74, %78 : vector<8x256xf32>
    %80 = vector.extract_strided_slice %33 {offsets = [4, 0], sizes = [1, 256], strides = [1, 1]} : vector<8x256xf32> to vector<1x256xf32>
    %81 = vector.broadcast %7 : vector<8x1xf32> to vector<8x256xf32>
    %82 = vector.broadcast %80 : vector<1x256xf32> to vector<8x256xf32>
    %83 = arith.mulf %81, %82 : vector<8x256xf32>
    %84 = arith.addf %79, %83 : vector<8x256xf32>
    %85 = vector.extract_strided_slice %33 {offsets = [5, 0], sizes = [1, 256], strides = [1, 1]} : vector<8x256xf32> to vector<1x256xf32>
    %86 = vector.broadcast %8 : vector<8x1xf32> to vector<8x256xf32>
    %87 = vector.broadcast %85 : vector<1x256xf32> to vector<8x256xf32>
    %88 = arith.mulf %86, %87 : vector<8x256xf32>
    %89 = arith.addf %84, %88 : vector<8x256xf32>
    %90 = vector.extract_strided_slice %33 {offsets = [6, 0], sizes = [1, 256], strides = [1, 1]} : vector<8x256xf32> to vector<1x256xf32>
    %91 = vector.broadcast %9 : vector<8x1xf32> to vector<8x256xf32>
    %92 = vector.broadcast %90 : vector<1x256xf32> to vector<8x256xf32>
    %93 = arith.mulf %91, %92 : vector<8x256xf32>
    %94 = arith.addf %89, %93 : vector<8x256xf32>
    %95 = vector.extract_strided_slice %33 {offsets = [7, 0], sizes = [1, 256], strides = [1, 1]} : vector<8x256xf32> to vector<1x256xf32>
    %96 = vector.broadcast %10 : vector<8x1xf32> to vector<8x256xf32>
    %97 = vector.broadcast %95 : vector<1x256xf32> to vector<8x256xf32>
    %98 = arith.mulf %96, %97 : vector<8x256xf32>
    %99 = arith.addf %94, %98 : vector<8x256xf32>
    %100 = arith.subf %99, %38 : vector<8x256xf32>
    %101 = arith.index_cast %14 : i32 to index
    %c0_22 = arith.constant 0 : index
    %102 = vector.load %arg11[%101, %c0_22] : memref<8x256xf32, #tpu.memory_space<vmem>>, vector<8x256xf32>
    %103 = arith.mulf %100, %100 : vector<8x256xf32>
    %104 = arith.addf %102, %103 : vector<8x256xf32>
    %105 = arith.index_cast %14 : i32 to index
    %c0_23 = arith.constant 0 : index
    %106 = vector.load %arg11[%105, %c0_23] : memref<8x256xf32, #tpu.memory_space<vmem>>, vector<8x256xf32>
    tpu.vector_store %arg11[%105, %c0_23], %104 {strides = array<i32>} : memref<8x256xf32, #tpu.memory_space<vmem>>, vector<8x256xf32>,
    %c1_i32 = arith.constant 1 : i32
    %c0_i32_24 = arith.constant 0 : i32
    %107 = arith.cmpi eq, %arg1, %c0_i32_24 : i32
    %108 = arith.extui %107 : i1 to i32
    %c0_i32_25 = arith.constant 0 : i32
    %109 = arith.cmpi ne, %108, %c0_i32_25 : i32
    scf.if %109 {
      %c0_26 = arith.constant 0 : index
      %c0_27 = arith.constant 0 : index
      %110 = vector.load %arg7[%c0_26, %c0_27] : memref<8x1xf32, #tpu.memory_space<vmem>>, vector<8x1xf32>
      %c0_28 = arith.constant 0 : index
      %c0_29 = arith.constant 0 : index
      %111 = vector.load %arg11[%c0_28, %c0_29] : memref<8x256xf32, #tpu.memory_space<vmem>>, vector<8x256xf32>
      %cst_30 = arith.constant dense<0.000000e+00> : vector<8xf32>
      %112 = vector.multi_reduction <add>, %111, %cst_30 [1] : vector<8x256xf32> to vector<8xf32>
      %113 = vector.shape_cast %112 : vector<8xf32> to vector<8x1xf32>
      %114 = arith.mulf %110, %113 : vector<8x1xf32>
      %c0_31 = arith.constant 0 : index
      %c0_32 = arith.constant 0 : index
      %115 = vector.load %arg10[%c0_31, %c0_32] : memref<8x1xf32, #tpu.memory_space<vmem>>, vector<8x1xf32>
      tpu.vector_store %arg10[%c0_31, %c0_32], %114 {strides = array<i32>} : memref<8x1xf32, #tpu.memory_space<vmem>>, vector<8x1xf32>,
    } else {
    }
    return
  }
  func.func @transform_0(%arg0: i32, %arg1: i32) -> (i32, i32) {
    %c0_i32 = arith.constant 0 : i32
    return %arg0, %arg1 : i32, i32
  }
  func.func @transform_1(%arg0: i32, %arg1: i32) -> (i32, i32) {
    %c0_i32 = arith.constant 0 : i32
    return %arg0, %arg1 : i32, i32
  }
  func.func @transform_2(%arg0: i32, %arg1: i32) -> (i32, i32) {
    %c0_i32 = arith.constant 0 : i32
    %c0_i32_0 = arith.constant 0 : i32
    return %arg0, %c0_i32 : i32, i32
  }
  func.func @transform_3(%arg0: i32, %arg1: i32) -> (i32, i32) {
    %c0_i32 = arith.constant 0 : i32
    %c0_i32_0 = arith.constant 0 : i32
    return %arg0, %c0_i32 : i32, i32
  }
  func.func @transform_4(%arg0: i32, %arg1: i32) -> (i32, i32) {
    %c0_i32 = arith.constant 0 : i32
    %c0_i32_0 = arith.constant 0 : i32
    return %arg0, %c0_i32 : i32, i32
  }
  func.func @transform_5(%arg0: i32, %arg1: i32) -> (i32, i32) {
    %c0_i32 = arith.constant 0 : i32
    %c0_i32_0 = arith.constant 0 : i32
    return %arg0, %c0_i32 : i32, i32
  }
  func.func @transform_6(%arg0: i32, %arg1: i32) -> (i32, i32) {
    %c0_i32 = arith.constant 0 : i32
    %c0_i32_0 = arith.constant 0 : i32
    %c0_i32_1 = arith.constant 0 : i32
    return %c0_i32, %c0_i32_0 : i32, i32
  }
  func.func @transform_7(%arg0: i32, %arg1: i32) -> (i32, i32) {
    %c0_i32 = arith.constant 0 : i32
    %c0_i32_0 = arith.constant 0 : i32
    %c0_i32_1 = arith.constant 0 : i32
    return %c0_i32, %c0_i32_0 : i32, i32
  }
  func.func @transform_8(%arg0: i32, %arg1: i32) -> (i32, i32) {
    %c0_i32 = arith.constant 0 : i32
    %c0_i32_0 = arith.constant 0 : i32
    return %arg0, %c0_i32 : i32, i32
  }
}

</mosaic_0001>

<llo_original>
// kernel: tile.10
$region0: #{tile.10}
  #allocation0 [shape = 's32[1]{0}', space=sflag, size = 0x4, scoped, tag = 'scoped memory for tile.10']
  %s0 = inlined_call_operand.vmem [shape: f32[4], index: 0, kind: input, shape index: {}]
  %s1 = inlined_call_operand.vmem [shape: f32[2,4], index: 1, kind: output, shape index: {}]
  // Predicated region
  $region2: #{tile.10} parent=0 // pred_check
    _
  $region3: #{tile.10} parent=0 // pred_check_branch
    %3 = sbr.rel (0) target = $region5
  $region4: #{tile.10} parent=0 // pred_region
    _
  $region5: #{tile.10} parent=0 // pred_fallthru
    _
  %v4 = vld [vmem:[%s0] ss:$0 sm:$0xff]
  %5 = vst [vmem:[%s1] sm:$0x3] %v4

// kernel: tile.11
$region0: #{tile.11}
  %s0 = inlined_call_operand.vmem [shape: f32[2,4], index: 0, kind: input, shape index: {}]
  %s1 = inlined_call_operand.vmem [shape: f32[8], index: 1, kind: output, shape index: {}]
  $region1: #{tile.11} parent=0
    #allocation0 [shape = 'u8[4096]{0}', space=vmem, size = 0x1000, scoped, tag = 'scoped mem for output reshape']
    #allocation1 [shape = 'u8[4096]{0}', space=vmem, size = 0x1000, scoped, tag = 'scoped mem for input reshape']
    %s3 = sshllo.u32 0, 2
    %v4 = vld [vmem:[%s0] sm:%s3]
    %5 = vst [vmem:[#allocation1] sm:%s3] %v4
    %v6 = vld [vmem:[#allocation1] sm:$0x1]
    %vm7 = vcmask 31744
    %8 = vst.msk [vmem:[#allocation0] sm:$0x1] %vm7, %v6
    %s9 = scalar_lea.vmem [#allocation1], 1
    %v10 = vld [vmem:[%s9] sm:$0x1]
    %11 = vrot.lane.b32.xlu0 %v10, 4
    %v12 = vpop.permute.xlu0 %11
    %vm13 = vcmask 64544
    %14 = vst.msk [vmem:[#allocation0] sm:$0x1] %vm13, %v12
    %s16 = sshllo.u32 0, 1
    %v18 = vld [vmem:[#allocation0] sm:%s16]
    %s19 = sshllo.u32 0, 1
    %20 = vst [vmem:[%s1] sm:%s19] %v18

// kernel: gaussian_diffusion_forward.1
$region0: #{gaussian_diffusion_forward.1}
  #allocation0 [shape = 'u32[]', space=smem, size = 0x4, offset = 0x4, fixed_abs, tag = 'smem constant byte address 0x4 - core index']
  #allocation1 [shape = 'u32[144,128]{1,0:T(1,128)}', space=vmem, size = 0x12000, scoped, tag = 'internal scratch']
  #allocation2 [shape = 'f32[8,256]{1,0:T(8,128)}', space=vmem, size = 0x2000, scoped, tag = 'scratch operand']
  %s0 = inlined_call_operand.vmem [shape: bf16[8,256], index: 0, kind: input, shape index: {}]
  %s1 = inlined_call_operand.vmem [shape: bf16[8,256], index: 1, kind: input, shape index: {}]
  %s2 = inlined_call_operand.vmem [shape: f32[8,1], index: 2, kind: input, shape index: {}]
  %s3 = inlined_call_operand.vmem [shape: f32[8,1], index: 3, kind: input, shape index: {}]
  %s4 = inlined_call_operand.vmem [shape: f32[8,1], index: 4, kind: input, shape index: {}]
  %s5 = inlined_call_operand.vmem [shape: f32[8,1], index: 5, kind: input, shape index: {}]
  %s6 = inlined_call_operand.vmem [shape: f32[64,1], index: 6, kind: input, shape index: {}]
  %s7 = inlined_call_operand.vmem [shape: f32[16,1], index: 7, kind: input, shape index: {}]
  %s8 = inlined_call_operand.vmem [shape: f32[8,1], index: 8, kind: output, shape index: {}]
  %s9 = sld [smem:[#allocation0]]
  $region50: #{gaussian_diffusion_forward.1} parent=0
    _
  %s11 = ssub.s32 1, %s9
  %s12 = scalar_select 0, %s11, %s9
  // Predicated region
  $region2: #{gaussian_diffusion_forward.1} parent=0 // pred_check
    _
  $region3: #{gaussian_diffusion_forward.1} parent=0 // pred_check_branch
    %14 = sbr.rel (0) target = $region5
  $region4: #{gaussian_diffusion_forward.1} parent=0 // pred_region
    _
  $region5: #{gaussian_diffusion_forward.1} parent=0 // pred_fallthru
    _
  // Predicated region
  $region6: #{gaussian_diffusion_forward.1} parent=0 // pred_check
    _
  $region7: #{gaussian_diffusion_forward.1} parent=0 // pred_check_branch
    %16 = sbr.rel (0) target = $region9
  $region8: #{gaussian_diffusion_forward.1} parent=0 // pred_region
    _
  $region9: #{gaussian_diffusion_forward.1} parent=0 // pred_fallthru
    _
  // Predicated region
  $region10: #{gaussian_diffusion_forward.1} parent=0 // pred_check
    _
  $region11: #{gaussian_diffusion_forward.1} parent=0 // pred_check_branch
    %18 = sbr.rel (0) target = $region13
  $region12: #{gaussian_diffusion_forward.1} parent=0 // pred_region
    _
  $region13: #{gaussian_diffusion_forward.1} parent=0 // pred_fallthru
    _
  // Predicated region
  $region14: #{gaussian_diffusion_forward.1} parent=0 // pred_check
    _
  $region15: #{gaussian_diffusion_forward.1} parent=0 // pred_check_branch
    %20 = sbr.rel (0) target = $region17
  $region16: #{gaussian_diffusion_forward.1} parent=0 // pred_region
    _
  $region17: #{gaussian_diffusion_forward.1} parent=0 // pred_fallthru
    _
  // Predicated region
  $region18: #{gaussian_diffusion_forward.1} parent=0 // pred_check
    _
  $region19: #{gaussian_diffusion_forward.1} parent=0 // pred_check_branch
    %22 = sbr.rel (0) target = $region21
  $region20: #{gaussian_diffusion_forward.1} parent=0 // pred_region
    _
  $region21: #{gaussian_diffusion_forward.1} parent=0 // pred_fallthru
    _
  // Predicated region
  $region22: #{gaussian_diffusion_forward.1} parent=0 // pred_check
    _
  $region23: #{gaussian_diffusion_forward.1} parent=0 // pred_check_branch
    %24 = sbr.rel (0) target = $region25
  $region24: #{gaussian_diffusion_forward.1} parent=0 // pred_region
    _
  $region25: #{gaussian_diffusion_forward.1} parent=0 // pred_fallthru
    _
  // Predicated region
  $region26: #{gaussian_diffusion_forward.1} parent=0 // pred_check
    _
  $region27: #{gaussian_diffusion_forward.1} parent=0 // pred_check_branch
    %26 = sbr.rel (0) target = $region29
  $region28: #{gaussian_diffusion_forward.1} parent=0 // pred_region
    _
  $region29: #{gaussian_diffusion_forward.1} parent=0 // pred_fallthru
    _
  // Predicated region
  $region30: #{gaussian_diffusion_forward.1} parent=0 // pred_check
    _
  $region31: #{gaussian_diffusion_forward.1} parent=0 // pred_check_branch
    %28 = sbr.rel (0) target = $region33
  $region32: #{gaussian_diffusion_forward.1} parent=0 // pred_region
    _
  $region33: #{gaussian_diffusion_forward.1} parent=0 // pred_fallthru
    _
  %p29 = scmp.eq.s32.totalorder 0, 0
  // Predicated region
  $region34: #{gaussian_diffusion_forward.1} parent=0 // pred_check
    %p30 = pneg %p29
  $region35: #{gaussian_diffusion_forward.1} parent=0 // pred_check_branch
    %32 = sbr.rel (%p30) target = $region37
  $region36: #{gaussian_diffusion_forward.1} parent=0 // pred_region
    %33 = vst [vmem:[#allocation2] sm:$0xff] 0.0
    %34 = vst [vmem:[#allocation2 + $0x8] sm:$0xff] 0.0
  $region37: #{gaussian_diffusion_forward.1} parent=0 // pred_fallthru
    _
  %v35 = vld [vmem:[%s6] sm:$0xff]
  %v36 = vld [vmem:[%s6 + $0x8] sm:$0xff]
  %v37 = vld [vmem:[%s6 + $0x10] sm:$0xff]
  %v38 = vld [vmem:[%s6 + $0x18] sm:$0xff]
  %v39 = vld [vmem:[%s6 + $0x20] sm:$0xff]
  %v40 = vld [vmem:[%s6 + $0x28] sm:$0xff]
  %v41 = vld [vmem:[%s6 + $0x30] sm:$0xff]
  %v42 = vld [vmem:[%s6 + $0x38] sm:$0xff]
  %v43 = vld [vmem:[%s7] sm:$0xff]
  %v44 = vld [vmem:[%s7 + $0x8] sm:$0xff]
  %s45 = smul.u32 0, 2
  %s46 = smul.addr %s45, 4
  %s47 = scalar_lea.vmem %s0, %s46
  %v48 = vld [vmem:[%s47] sm:$0xff]
  %v49 = vunpack.c.l.bf16 %v48
  %v50 = vunpack.c.h.bf16 %v48
  %s51 = smul.addr %s45, 4
  %s52 = scalar_lea.vmem %s1, %s51
  %v53 = vld [vmem:[%s52] sm:$0xff]
  %v54 = vunpack.c.l.bf16 %v53
  %v55 = vunpack.c.h.bf16 %v53
  %v56 = vld [vmem:[%s2] sm:$0xff]
  %v57 = vld [vmem:[%s3] sm:$0xff]
  %v58 = vmul.f32 %v49, 2.0
  %v59 = vmul.f32 %v50, 2.0
  %v60 = vsub.f32 %v58, 1.0
  %v61 = vsub.f32 %v59, 1.0
  %63 = vset.pattern.permute.xlu0 0
  %64 = vperm.xlu0 %63, %v56
  %v65 = vpop.permute.xlu0 %64
  %v67 = vmul.f32 %v65, %v60
  %v68 = vmul.f32 %v65, %v61
  %70 = vset.pattern.permute.xlu0 0
  %71 = vperm.xlu0 %70, %v57
  %v72 = vpop.permute.xlu0 %71
  %v74 = vmul.f32 %v72, %v54
  %v75 = vmul.f32 %v72, %v55
  %v76 = vadd.f32 %v67, %v74
  %v77 = vadd.f32 %v68, %v75
  %v78 = vmul.f32 %v65, %v54
  %v79 = vmul.f32 %v65, %v55
  %v80 = vmul.f32 %v72, %v60
  %v81 = vmul.f32 %v72, %v61
  %v82 = vsub.f32 %v78, %v80
  %v83 = vsub.f32 %v79, %v81
  %v84 = vld [vmem:[%s4] sm:$0xff]
  %vm85 = vcmp.ne.f32.partialorder %v60, 0.0
  %vm86 = vcmp.ne.f32.partialorder %v61, 0.0
  %v87 = vsel %vm85, 1, 0
  %v88 = vsel %vm86, 1, 0
  %v89 = vcvt.s32.f32 %v87
  %v90 = vcvt.s32.f32 %v88
  %92 = vset.pattern.permute.xlu0 0
  %93 = vperm.xlu0 %92, %v43
  %v94 = vpop.permute.xlu0 %93
  %v96 = vlaneseq
  %v97 = vshrl.u32 %v96, 7
  %v98 = vsub.s32 0, %v97
  %v99 = vrot.slane %v89, %v98
  %v100 = vlaneseq
  %v101 = vshrl.u32 %v100, 7
  %v102 = vsub.s32 0, %v101
  %v103 = vrot.slane %v90, %v102
  %v104 = vmul.f32 %v94, %v99
  %v105 = vmul.f32 %v94, %v103
  %107 = vset.pattern.permute.xlu0 0
  %108 = vperm.xlu0 %107, %v84
  %v109 = vpop.permute.xlu0 %108
  %v111 = vadd.f32 %v109, %v104
  %v112 = vadd.f32 %v109, %v105
  %114 = vset.pattern.permute.xlu0 0
  %115 = vperm.xlu0 %114, %v44
  %v116 = vpop.permute.xlu0 %115
  %v118 = vlaneseq
  %v119 = vshrl.u32 %v118, 7
  %v120 = vsub.s32 4, %v119
  %v121 = vrot.slane %v89, %v120
  %v122 = vlaneseq
  %v123 = vshrl.u32 %v122, 7
  %v124 = vsub.s32 4, %v123
  %v125 = vrot.slane %v90, %v124
  %v126 = vmul.f32 %v116, %v121
  %v127 = vmul.f32 %v116, %v125
  %v128 = vadd.f32 %v111, %v126
  %v129 = vadd.f32 %v112, %v127
  %131 = vset.pattern.permute.xlu0 0
  %132 = vperm.xlu0 %131, %v35
  %v133 = vpop.permute.xlu0 %132
  %v135 = vlaneseq
  %v136 = vshrl.u32 %v135, 7
  %v137 = vsub.s32 0, %v136
  %v138 = vrot.slane %v76, %v137
  %v139 = vlaneseq
  %v140 = vshrl.u32 %v139, 7
  %v141 = vsub.s32 0, %v140
  %v142 = vrot.slane %v77, %v141
  %v143 = vmul.f32 %v133, %v138
  %v144 = vmul.f32 %v133, %v142
  %v145 = vadd.f32 %v128, %v143
  %v146 = vadd.f32 %v129, %v144
  %148 = vset.pattern.permute.xlu0 0
  %149 = vperm.xlu0 %148, %v36
  %v150 = vpop.permute.xlu0 %149
  %v152 = vlaneseq
  %v153 = vshrl.u32 %v152, 7
  %v154 = vsub.s32 1, %v153
  %v155 = vrot.slane %v76, %v154
  %v156 = vlaneseq
  %v157 = vshrl.u32 %v156, 7
  %v158 = vsub.s32 1, %v157
  %v159 = vrot.slane %v77, %v158
  %v160 = vmul.f32 %v150, %v155
  %v161 = vmul.f32 %v150, %v159
  %v162 = vadd.f32 %v145, %v160
  %v163 = vadd.f32 %v146, %v161
  %165 = vset.pattern.permute.xlu0 0
  %166 = vperm.xlu0 %165, %v37
  %v167 = vpop.permute.xlu0 %166
  %v169 = vlaneseq
  %v170 = vshrl.u32 %v169, 7
  %v171 = vsub.s32 2, %v170
  %v172 = vrot.slane %v76, %v171
  %v173 = vlaneseq
  %v174 = vshrl.u32 %v173, 7
  %v175 = vsub.s32 2, %v174
  %v176 = vrot.slane %v77, %v175
  %v177 = vmul.f32 %v167, %v172
  %v178 = vmul.f32 %v167, %v176
  %v179 = vadd.f32 %v162, %v177
  %v180 = vadd.f32 %v163, %v178
  %182 = vset.pattern.permute.xlu0 0
  %183 = vperm.xlu0 %182, %v38
  %v184 = vpop.permute.xlu0 %183
  %v186 = vlaneseq
  %v187 = vshrl.u32 %v186, 7
  %v188 = vsub.s32 3, %v187
  %v189 = vrot.slane %v76, %v188
  %v190 = vlaneseq
  %v191 = vshrl.u32 %v190, 7
  %v192 = vsub.s32 3, %v191
  %v193 = vrot.slane %v77, %v192
  %v194 = vmul.f32 %v184, %v189
  %v195 = vmul.f32 %v184, %v193
  %v196 = vadd.f32 %v179, %v194
  %v197 = vadd.f32 %v180, %v195
  %199 = vset.pattern.permute.xlu0 0
  %200 = vperm.xlu0 %199, %v39
  %v201 = vpop.permute.xlu0 %200
  %v203 = vlaneseq
  %v204 = vshrl.u32 %v203, 7
  %v205 = vsub.s32 4, %v204
  %v206 = vrot.slane %v76, %v205
  %v207 = vlaneseq
  %v208 = vshrl.u32 %v207, 7
  %v209 = vsub.s32 4, %v208
  %v210 = vrot.slane %v77, %v209
  %v211 = vmul.f32 %v201, %v206
  %v212 = vmul.f32 %v201, %v210
  %v213 = vadd.f32 %v196, %v211
  %v214 = vadd.f32 %v197, %v212
  %216 = vset.pattern.permute.xlu0 0
  %217 = vperm.xlu0 %216, %v40
  %v218 = vpop.permute.xlu0 %217
  %v220 = vlaneseq
  %v221 = vshrl.u32 %v220, 7
  %v222 = vsub.s32 5, %v221
  %v223 = vrot.slane %v76, %v222
  %v224 = vlaneseq
  %v225 = vshrl.u32 %v224, 7
  %v226 = vsub.s32 5, %v225
  %v227 = vrot.slane %v77, %v226
  %v228 = vmul.f32 %v218, %v223
  %v229 = vmul.f32 %v218, %v227
  %v230 = vadd.f32 %v213, %v228
  %v231 = vadd.f32 %v214, %v229
  %233 = vset.pattern.permute.xlu0 0
  %234 = vperm.xlu0 %233, %v41
  %v235 = vpop.permute.xlu0 %234
  %v237 = vlaneseq
  %v238 = vshrl.u32 %v237, 7
  %v239 = vsub.s32 6, %v238
  %v240 = vrot.slane %v76, %v239
  %v241 = vlaneseq
  %v242 = vshrl.u32 %v241, 7
  %v243 = vsub.s32 6, %v242
  %v244 = vrot.slane %v77, %v243
  %v245 = vmul.f32 %v235, %v240
  %v246 = vmul.f32 %v235, %v244
  %v247 = vadd.f32 %v230, %v245
  %v248 = vadd.f32 %v231, %v246
  %250 = vset.pattern.permute.xlu0 0
  %251 = vperm.xlu0 %250, %v42
  %v252 = vpop.permute.xlu0 %251
  %v254 = vlaneseq
  %v255 = vshrl.u32 %v254, 7
  %v256 = vsub.s32 7, %v255
  %v257 = vrot.slane %v76, %v256
  %v258 = vlaneseq
  %v259 = vshrl.u32 %v258, 7
  %v260 = vsub.s32 7, %v259
  %v261 = vrot.slane %v77, %v260
  %v262 = vmul.f32 %v252, %v257
  %v263 = vmul.f32 %v252, %v261
  %v264 = vadd.f32 %v247, %v262
  %v265 = vadd.f32 %v248, %v263
  %v266 = vsub.f32 %v264, %v82
  %v267 = vsub.f32 %v265, %v83
  %s268 = smul.addr %s45, 8
  %s269 = scalar_lea.vmem [#allocation2], %s268
  %v270 = vld [vmem:[%s269] sm:$0xff]
  %v271 = vld [vmem:[%s269 + $0x8] sm:$0xff]
  %v272 = vmul.f32 %v266, %v266
  %v273 = vmul.f32 %v267, %v267
  %v274 = vadd.f32 %v270, %v272
  %v275 = vadd.f32 %v271, %v273
  %276 = vst [vmem:[%s269] sm:$0xff] %v274
  %277 = vst [vmem:[%s269 + $0x8] sm:$0xff] %v275
  // Predicated region
  $region38: #{gaussian_diffusion_forward.1} parent=0 // pred_check
    %p278 = pneg %p29
  $region39: #{gaussian_diffusion_forward.1} parent=0 // pred_check_branch
    %280 = sbr.rel (%p278) target = $region41
  $region40: #{gaussian_diffusion_forward.1} parent=0 // pred_region
    %v281 = vld [vmem:[%s5] sm:$0xff]
    %v282 = vld [vmem:[#allocation2] sm:$0xff]
    %v283 = vld [vmem:[#allocation2 + $0x8] sm:$0xff]
    %v284 = vadd.f32 %v282, %v283
    %285 = vadd.xlane.f32.xlu0 %v284
    %v286 = vpop.xlane.xlu0 %285
    %v287 = vmul.f32 %v281, %v286
    %vm288 = vcmask 7168
    %289 = vst.msk [vmem:[%s8] sm:$0xff] %vm288, %v287
  $region41: #{gaussian_diffusion_forward.1} parent=0 // pred_fallthru
    _
  // Predicated region
  $region42: #{gaussian_diffusion_forward.1} parent=0 // pred_check
    _
  $region43: #{gaussian_diffusion_forward.1} parent=0 // pred_check_branch
    %291 = sbr.rel (0) target = $region45
  $region44: #{gaussian_diffusion_forward.1} parent=0 // pred_region
    _
  $region45: #{gaussian_diffusion_forward.1} parent=0 // pred_fallthru
    _
  // Predicated region
  $region46: #{gaussian_diffusion_forward.1} parent=0 // pred_check
    _
  $region47: #{gaussian_diffusion_forward.1} parent=0 // pred_check_branch
    %293 = sbr.rel (0) target = $region49
  $region48: #{gaussian_diffusion_forward.1} parent=0 // pred_region
    _
  $region49: #{gaussian_diffusion_forward.1} parent=0 // pred_fallthru
    _

</llo_original>
